<compile_context>
chip_gen: v7x
topology: tpu7x:2x2x1
jax: 0.10.0
libtpu: 0.0.40
codegen_flags: <defaults>
</compile_context>

<pallas_src>
import jax
import jax.numpy as jnp
from jax.experimental import pallas as pl
from jax.experimental.pallas import tpu as pltpu

# ----------------------------------------------------------------------------
# Packed-parameter layout (all offsets 8-row / sublane aligned).
# ----------------------------------------------------------------------------
IN_DIM = 12          # state dimension of the Agent
LANES = 128          # every feature dim (12, H1, H2, H3, 3) zero-padded to 128 lanes
W_ROWS = 128         # every weight block padded to 128 rows (contraction dim)
B_ROWS = 8           # each bias occupies one row at an 8-row-aligned offset

OFF_W1 = 0
OFF_B1 = OFF_W1 + W_ROWS        # 128
OFF_W2 = OFF_B1 + B_ROWS        # 136
OFF_B2 = OFF_W2 + W_ROWS        # 264
OFF_W3 = OFF_B2 + B_ROWS        # 272
OFF_B3 = OFF_W3 + W_ROWS        # 400
OFF_W4 = OFF_B3 + B_ROWS        # 408
OFF_B4 = OFF_W4 + W_ROWS        # 536
TOTAL_ROWS = OFF_B4 + B_ROWS    # 544

N_ACTIONS = 3
OUT_LANES = 8        # narrow output slab (full minor dim of the output array)
NEG_FILL = -1e30     # padded logit lanes -> exp() underflows to exactly 0


# ----------------------------------------------------------------------------
# Kernel: whole 4-layer MLP + softmax for one batch tile, params from one slab.
# ----------------------------------------------------------------------------
def _agent_mlp_kernel(x_ref, p_ref, out_ref, xpad_ref):
    # Lane-pad the (bb, 12) input tile to a 128-lane MXU operand in VMEM.
    xpad_ref[...] = jnp.zeros_like(xpad_ref)
    xpad_ref[:, 0:IN_DIM] = x_ref[...]
    x = xpad_ref[...]                                        # (bb, 128)

    def layer(h, off_w, off_b):
        w = p_ref[pl.ds(off_w, W_ROWS), :]                   # (128, 128) f32
        b = p_ref[pl.ds(off_b, 1), :]                        # (1, 128)
        return jnp.dot(h, w, preferred_element_type=jnp.float32) + b

    h = jnp.maximum(layer(x, OFF_W1, OFF_B1), 0.0)
    h = jnp.maximum(layer(h, OFF_W2, OFF_B2), 0.0)
    h = jnp.maximum(layer(h, OFF_W3, OFF_B3), 0.0)
    logits = layer(h, OFF_W4, OFF_B4)                        # lanes >=3 are ~ -1e30

    m = jnp.max(logits, axis=-1, keepdims=True)
    e = jnp.exp(logits - m)                                  # padded lanes -> exactly 0
    denom = jnp.sum(e, axis=-1, keepdims=True)
    # Exact divide: normalization error is f32 rounding only (denominator is
    # a (bb,1) vector, so the cost of the exact path is negligible).
    out_ref[...] = e[:, :OUT_LANES] / denom


# ----------------------------------------------------------------------------
# Wrapper.
# ----------------------------------------------------------------------------
def _round_up(x, m):
    return (x + m - 1) // m * m


def _choose_block_b(batch):
    """Batch-tile heuristic (see perf notes in header)."""
    pb = _round_up(max(batch, 1), 8)
    if pb <= 128:
        return pb                              # one tile, grid=(1,)
    # batch > 128: keep >= 2 grid steps (v7x: 2 TensorCores, "parallel" shards
    # the grid); cap tiles at 512 rows (v5e/v6e single-TC roofline sweet spot).
    return min(512, _round_up(pl.cdiv(pb, 2), 8))


def agent_forward(x, packed_params, *, block_b=None):
    """Agent MLP forward. x: (batch, 12) float; packed_params: (544, 128) f32."""
    batch, in_dim = x.shape
    assert in_dim == IN_DIM, f"expected {IN_DIM} input features, got {in_dim}"

    bb = block_b if block_b is not None else _choose_block_b(batch)
    bb = _round_up(min(bb, _round_up(batch, 8)), 8)
    padded_batch = _round_up(batch, bb)

    xr = x.astype(jnp.float32)
    if padded_batch != batch:
        # Row-pad only (12 lanes stay 12) -- negligible vs. the old 128-lane slab.
        xr = jnp.zeros((padded_batch, IN_DIM), jnp.float32).at[:batch].set(xr)

    grid = (padded_batch // bb,)
    flops = 2 * padded_batch * LANES * LANES * 4
    bytes_accessed = 4 * (padded_batch * IN_DIM            # input
                          + TOTAL_ROWS * LANES             # resident params
                          + padded_batch * OUT_LANES)      # output
    cost = pl.CostEstimate(flops=flops,
                           transcendentals=padded_batch * LANES,
                           bytes_accessed=bytes_accessed)

    out = pl.pallas_call(
        _agent_mlp_kernel,
        out_shape=jax.ShapeDtypeStruct((padded_batch, OUT_LANES), jnp.float32),
        grid=grid,
        in_specs=[
            pl.BlockSpec((bb, IN_DIM), lambda i: (i, 0)),            # batch tile (12 lanes)
            pl.BlockSpec((TOTAL_ROWS, LANES), lambda i: (0, 0)),     # params, resident
        ],
        out_specs=pl.BlockSpec((bb, OUT_LANES), lambda i: (i, 0)),   # narrow output slab
        scratch_shapes=[pltpu.VMEM((bb, LANES), jnp.float32)],       # lane-padded x
        compiler_params=pltpu.CompilerParams(
            dimension_semantics=("parallel",)),
        cost_estimate=cost,
    )(xr, packed_params)

    return out[:batch, :N_ACTIONS]


# ----------------------------------------------------------------------------
# Parameter construction / packing.
# ----------------------------------------------------------------------------
def init_params(key, in_dim=IN_DIM, h1=32, h2=32, h3=32, out_dim=N_ACTIONS):
    """nn.Linear-style U(-1/sqrt(in), 1/sqrt(in)) init. Weights stored as (in, out)."""
    dims = [(in_dim, h1), (h1, h2), (h2, h3), (h3, out_dim)]
    params = []
    keys = jax.random.split(key, 2 * len(dims))
    for i, (fan_in, fan_out) in enumerate(dims):
        bound = 1.0 / jnp.sqrt(jnp.float32(fan_in))
        w = jax.random.uniform(keys[2 * i], (fan_in, fan_out),
                               minval=-bound, maxval=bound, dtype=jnp.float32)
        b = jax.random.uniform(keys[2 * i + 1], (1, fan_out),
                               minval=-bound, maxval=bound, dtype=jnp.float32)
        params.extend([w, b])
    return tuple(params)


def pack_params(params):
    """Pack all weights/biases into one (544, 128) f32 slab (built once, reused)."""
    w1, b1, w2, b2, w3, b3, w4, b4 = params
    for w in (w1, w2, w3, w4):
        assert w.shape[0] <= W_ROWS and w.shape[1] <= LANES
    slab = jnp.zeros((TOTAL_ROWS, LANES), jnp.float32)

    def put_w(s, off, w):
        return s.at[off:off + w.shape[0], :w.shape[1]].set(w)

    def put_b(s, off, b):
        return s.at[off, :b.shape[-1]].set(b.reshape(-1))

    slab = put_w(slab, OFF_W1, w1); slab = put_b(slab, OFF_B1, b1)
    slab = put_w(slab, OFF_W2, w2); slab = put_b(slab, OFF_B2, b2)
    slab = put_w(slab, OFF_W3, w3); slab = put_b(slab, OFF_B3, b3)
    slab = put_w(slab, OFF_W4, w4)
    # Last-layer bias: padded logit lanes get a large negative so softmax ignores them.
    slab = slab.at[OFF_B4, :].set(NEG_FILL)
    slab = slab.at[OFF_B4, :b4.shape[-1]].set(b4.reshape(-1))
    return slab


def _reference_forward(x, params):
    w1, b1, w2, b2, w3, b3, w4, b4 = params
    hp = jax.lax.Precision.HIGHEST          # match the kernel's f32 matmuls
    h = jnp.maximum(jnp.dot(x, w1, precision=hp) + b1, 0.0)
    h = jnp.maximum(jnp.dot(h, w2, precision=hp) + b2, 0.0)
    h = jnp.maximum(jnp.dot(h, w3, precision=hp) + b3, 0.0)
    return jax.nn.softmax(jnp.dot(h, w4, precision=hp) + b4, axis=-1)


if __name__ == "__main__":
    key = jax.random.PRNGKey(0)
    k_params, k_x = jax.random.split(key)

    # Small shapes consistent with the module: state dim = 12, 3 actions.
    batch = 8
    params = init_params(k_params, in_dim=IN_DIM, h1=32, h2=32, h3=32, out_dim=N_ACTIONS)
    packed = pack_params(params)
    x = jax.random.normal(k_x, (batch, IN_DIM), dtype=jnp.float32)

    out = agent_forward(x, packed)
    out = jax.block_until_ready(out)

    ref = _reference_forward(x, params)
    assert out.shape == (batch, N_ACTIONS)
    # Exact divide -> rows sum to 1 up to f32 rounding.
    assert bool(jnp.allclose(jnp.sum(out, axis=-1), 1.0, atol=1e-4))
    assert bool(jnp.allclose(out, ref, atol=2e-3, rtol=2e-3))

    print("KERNEL_OK")
</pallas_src>

<mosaic_0001>
module attributes {stable_mosaic.version = 11 : i64} {
  func.func @_agent_mlp_kernel(%arg0: i32, %arg1: memref<8x12xf32, #tpu.memory_space<vmem>>, %arg2: memref<544x128xf32, #tpu.memory_space<vmem>>, %arg3: memref<8x8xf32, #tpu.memory_space<vmem>>, %arg4: memref<8x128xf32, #tpu.memory_space<vmem>>) attributes {dimension_semantics = [#tpu.dimension_semantics<parallel>], iteration_bounds = array<i64: 1>, scalar_prefetch = 0 : i64, scratch_operands = 1 : i64, tpu.core_type = #tpu.core_type<tc>, window_params = [{transform_indices = @transform_0, window_bounds = array<i64: 8, 12>}, {pipeline_mode = #tpu.pipeline_mode<synchronous>, transform_indices = @transform_1, window_bounds = array<i64: 544, 128>}, {transform_indices = @transform_2, window_bounds = array<i64: 8, 8>}]} {
    %cst = arith.constant 0.000000e+00 : f32
    %0 = vector.broadcast %cst : f32 to vector<8x128xf32>
    %c0 = arith.constant 0 : index
    %c0_0 = arith.constant 0 : index
    %1 = vector.load %arg4[%c0, %c0_0] : memref<8x128xf32, #tpu.memory_space<vmem>>, vector<8x128xf32>
    tpu.vector_store %arg4[%c0, %c0_0], %0 {strides = array<i32>} : memref<8x128xf32, #tpu.memory_space<vmem>>, vector<8x128xf32>,
    %c0_1 = arith.constant 0 : index
    %c0_2 = arith.constant 0 : index
    %2 = vector.load %arg1[%c0_1, %c0_2] : memref<8x12xf32, #tpu.memory_space<vmem>>, vector<8x12xf32>
    %c0_3 = arith.constant 0 : index
    %c0_4 = arith.constant 0 : index
    %3 = vector.load %arg4[%c0_3, %c0_4] : memref<8x128xf32, #tpu.memory_space<vmem>>, vector<8x12xf32>
    tpu.vector_store %arg4[%c0_3, %c0_4], %2 {strides = array<i32>} : memref<8x128xf32, #tpu.memory_space<vmem>>, vector<8x12xf32>,
    %c0_5 = arith.constant 0 : index
    %c0_6 = arith.constant 0 : index
    %4 = vector.load %arg4[%c0_5, %c0_6] : memref<8x128xf32, #tpu.memory_space<vmem>>, vector<8x128xf32>
    %c0_7 = arith.constant 0 : index
    %c0_8 = arith.constant 0 : index
    %5 = vector.load %arg2[%c0_7, %c0_8] : memref<544x128xf32, #tpu.memory_space<vmem>>, vector<128x128xf32>
    %c128 = arith.constant 128 : index
    %c0_9 = arith.constant 0 : index
    %6 = vector.load %arg2[%c128, %c0_9] : memref<544x128xf32, #tpu.memory_space<vmem>>, vector<1x128xf32>
    %cst_10 = arith.constant dense<0.000000e+00> : vector<8x128xf32>
    %7 = tpu.matmul %4, %5, %cst_10 {dimension_numbers = #tpu.dot_dimension_numbers<[1], [0], [0], [1], [0, 0, 1, 1], [], []>} : vector<8x128xf32>, vector<128x128xf32>, vector<8x128xf32> -> vector<8x128xf32>
    %8 = vector.broadcast %6 : vector<1x128xf32> to vector<8x128xf32>
    %9 = arith.addf %7, %8 : vector<8x128xf32>
    %cst_11 = arith.constant 0.000000e+00 : f32
    %10 = vector.broadcast %cst_11 : f32 to vector<8x128xf32>
    %11 = arith.maximumf %9, %10 : vector<8x128xf32>
    %c136 = arith.constant 136 : index
    %c0_12 = arith.constant 0 : index
    %12 = vector.load %arg2[%c136, %c0_12] : memref<544x128xf32, #tpu.memory_space<vmem>>, vector<128x128xf32>
    %c264 = arith.constant 264 : index
    %c0_13 = arith.constant 0 : index
    %13 = vector.load %arg2[%c264, %c0_13] : memref<544x128xf32, #tpu.memory_space<vmem>>, vector<1x128xf32>
    %cst_14 = arith.constant dense<0.000000e+00> : vector<8x128xf32>
    %14 = tpu.matmul %11, %12, %cst_14 {dimension_numbers = #tpu.dot_dimension_numbers<[1], [0], [0], [1], [0, 0, 1, 1], [], []>} : vector<8x128xf32>, vector<128x128xf32>, vector<8x128xf32> -> vector<8x128xf32>
    %15 = vector.broadcast %13 : vector<1x128xf32> to vector<8x128xf32>
    %16 = arith.addf %14, %15 : vector<8x128xf32>
    %cst_15 = arith.constant 0.000000e+00 : f32
    %17 = vector.broadcast %cst_15 : f32 to vector<8x128xf32>
    %18 = arith.maximumf %16, %17 : vector<8x128xf32>
    %c272 = arith.constant 272 : index
    %c0_16 = arith.constant 0 : index
    %19 = vector.load %arg2[%c272, %c0_16] : memref<544x128xf32, #tpu.memory_space<vmem>>, vector<128x128xf32>
    %c400 = arith.constant 400 : index
    %c0_17 = arith.constant 0 : index
    %20 = vector.load %arg2[%c400, %c0_17] : memref<544x128xf32, #tpu.memory_space<vmem>>, vector<1x128xf32>
    %cst_18 = arith.constant dense<0.000000e+00> : vector<8x128xf32>
    %21 = tpu.matmul %18, %19, %cst_18 {dimension_numbers = #tpu.dot_dimension_numbers<[1], [0], [0], [1], [0, 0, 1, 1], [], []>} : vector<8x128xf32>, vector<128x128xf32>, vector<8x128xf32> -> vector<8x128xf32>
    %22 = vector.broadcast %20 : vector<1x128xf32> to vector<8x128xf32>
    %23 = arith.addf %21, %22 : vector<8x128xf32>
    %cst_19 = arith.constant 0.000000e+00 : f32
    %24 = vector.broadcast %cst_19 : f32 to vector<8x128xf32>
    %25 = arith.maximumf %23, %24 : vector<8x128xf32>
    %c408 = arith.constant 408 : index
    %c0_20 = arith.constant 0 : index
    %26 = vector.load %arg2[%c408, %c0_20] : memref<544x128xf32, #tpu.memory_space<vmem>>, vector<128x128xf32>
    %c536 = arith.constant 536 : index
    %c0_21 = arith.constant 0 : index
    %27 = vector.load %arg2[%c536, %c0_21] : memref<544x128xf32, #tpu.memory_space<vmem>>, vector<1x128xf32>
    %cst_22 = arith.constant dense<0.000000e+00> : vector<8x128xf32>
    %28 = tpu.matmul %25, %26, %cst_22 {dimension_numbers = #tpu.dot_dimension_numbers<[1], [0], [0], [1], [0, 0, 1, 1], [], []>} : vector<8x128xf32>, vector<128x128xf32>, vector<8x128xf32> -> vector<8x128xf32>
    %29 = vector.broadcast %27 : vector<1x128xf32> to vector<8x128xf32>
    %30 = arith.addf %28, %29 : vector<8x128xf32>
    %cst_23 = arith.constant dense<0xFF800000> : vector<8xf32>
    %31 = vector.multi_reduction <maximumf>, %30, %cst_23 [1] : vector<8x128xf32> to vector<8xf32>
    %32 = vector.shape_cast %31 : vector<8xf32> to vector<8x1xf32>
    %33 = vector.broadcast %32 : vector<8x1xf32> to vector<8x128xf32>
    %34 = arith.subf %30, %33 : vector<8x128xf32>
    %35 = math.exp %34 : vector<8x128xf32>
    %cst_24 = arith.constant dense<0.000000e+00> : vector<8xf32>
    %36 = vector.multi_reduction <add>, %35, %cst_24 [1] : vector<8x128xf32> to vector<8xf32>
    %37 = vector.shape_cast %36 : vector<8xf32> to vector<8x1xf32>
    %38 = vector.extract_strided_slice %35 {offsets = [0, 0], sizes = [8, 8], strides = [1, 1]} : vector<8x128xf32> to vector<8x8xf32>
    %39 = vector.broadcast %37 : vector<8x1xf32> to vector<8x8xf32>
    %40 = arith.divf %38, %39 : vector<8x8xf32>
    %c0_25 = arith.constant 0 : index
    %c0_26 = arith.constant 0 : index
    %41 = vector.load %arg3[%c0_25, %c0_26] : memref<8x8xf32, #tpu.memory_space<vmem>>, vector<8x8xf32>
    tpu.vector_store %arg3[%c0_25, %c0_26], %40 {strides = array<i32>} : memref<8x8xf32, #tpu.memory_space<vmem>>, vector<8x8xf32>,
    return
  }
  func.func @transform_0(%arg0: i32) -> (i32, i32) {
    %c0_i32 = arith.constant 0 : i32
    %c0_i32_0 = arith.constant 0 : i32
    return %arg0, %c0_i32 : i32, i32
  }
  func.func @transform_1(%arg0: i32) -> (i32, i32) {
    %c0_i32 = arith.constant 0 : i32
    %c0_i32_0 = arith.constant 0 : i32
    %c0_i32_1 = arith.constant 0 : i32
    return %c0_i32, %c0_i32_0 : i32, i32
  }
  func.func @transform_2(%arg0: i32) -> (i32, i32) {
    %c0_i32 = arith.constant 0 : i32
    %c0_i32_0 = arith.constant 0 : i32
    return %arg0, %c0_i32 : i32, i32
  }
}

</mosaic_0001>

<llo_original>
// kernel: tpu_custom_call.1
$region0: #{tpu_custom_call.1}
  #allocation0 [shape = 'u32[]', space=smem, size = 0x4, offset = 0x4, fixed_abs, tag = 'smem constant byte address 0x4 - core index']
  #allocation1 [shape = 'u32[144,128]{1,0:T(1,128)}', space=vmem, size = 0x12000, scoped, tag = 'internal scratch']
  #allocation2 [shape = 'f32[8,128]{1,0:T(8,128)}', space=vmem, size = 0x1000, scoped, tag = 'scratch operand']
  %s0 = inlined_call_operand.hbm [shape: f32[8,12], index: 0, kind: input, shape index: {}]
  %s1 = inlined_call_operand.hbm [shape: f32[544,128], index: 1, kind: input, shape index: {}]
  %s2 = inlined_call_operand.hbm [shape: f32[8,8], index: 2, kind: output, shape index: {}]
  %s3 = sld [smem:[#allocation0]]
  $region26: #{tpu_custom_call.1} parent=0
    _
  %s5 = ssub.s32 1, %s3
  %s6 = scalar_select 0, %s5, %s3
  $region1: #{tpu_custom_call.1} parent=0
    #allocation3 [shape = 'u8[4096]{0}', space=vmem, size = 0x1000, scoped, tag = 'input window, operand 0, single buffered']
    #allocation4 [shape = 's32[1]{0}', space=sflag, size = 0x4, scoped, tag = 'scoped memory for tpu_custom_call.1']
    #allocation5 [shape = 's32[1]{0}', space=sflag, size = 0x4, scoped, tag = 'scoped memory for tpu_custom_call.1']
    #allocation6 [shape = 'u8[278528]{0}', space=vmem, size = 0x44000, scoped, tag = 'input window, operand 1, single buffered']
    #allocation7 [shape = 's32[1]{0}', space=sflag, size = 0x4, scoped, tag = 'scoped memory for tpu_custom_call.1']
    #allocation8 [shape = 'u8[4096]{0}', space=vmem, size = 0x1000, scoped, tag = 'output window, operand 0, single buffered']
    %7 = vsyncpa [#allocation4], 0
    %8 = vsyncpa [#allocation7], 0
    %9 = vsyncpa [#allocation5], 0
    // Predicated region
    $region2: #{tpu_custom_call.1} parent=1 // pred_check
      _
    $region3: #{tpu_custom_call.1} parent=1 // pred_check_branch
      %11 = sbr.rel (0) target = $region5
    $region4: #{tpu_custom_call.1} parent=1 // pred_region
      %s13 = ssub.s32 128, 128
      %14 = vsyncadd [#allocation4], %s13
      %s16 = sshll.u32 [#allocation3], 4
      %s17 = int_to_ptr.vmem [resolvable:$true] %s16
      %19 = dma.hbm_to_vmem [thread:$0]  %s0, 128, %s17, [#allocation4]
    $region5: #{tpu_custom_call.1} parent=1 // pred_fallthru
      _
    // Predicated region
    $region6: #{tpu_custom_call.1} parent=1 // pred_check
      _
    $region7: #{tpu_custom_call.1} parent=1 // pred_check_branch
      %21 = sbr.rel (0) target = $region9
    $region8: #{tpu_custom_call.1} parent=1 // pred_region
      %s23 = ssub.s32 8704, 8704
      %24 = vsyncadd [#allocation7], %s23
      %s25 = sshll.u32 [#allocation6], 4
      %s26 = int_to_ptr.vmem [resolvable:$true] %s25
      %31 = dma.hbm_to_vmem [thread:$0]  %s1, 8704, %s26, [#allocation7], 128, 128, 8
    $region9: #{tpu_custom_call.1} parent=1 // pred_fallthru
      _
    // Predicated region
    $region10: #{tpu_custom_call.1} parent=1 // pred_check
      _
    $region11: #{tpu_custom_call.1} parent=1 // pred_check_branch
      %33 = sbr.rel (0) target = $region13
    $region12: #{tpu_custom_call.1} parent=1 // pred_region
      %34 = dma.done [#allocation4], 128
    $region13: #{tpu_custom_call.1} parent=1 // pred_fallthru
      _
    // Predicated region
    $region14: #{tpu_custom_call.1} parent=1 // pred_check
      _
    $region15: #{tpu_custom_call.1} parent=1 // pred_check_branch
      %36 = sbr.rel (0) target = $region17
    $region16: #{tpu_custom_call.1} parent=1 // pred_region
      %37 = dma.done [#allocation7], 8704
    $region17: #{tpu_custom_call.1} parent=1 // pred_fallthru
      _
    %38 = vst [vmem:[#allocation2] sm:$0xff] 0.0
    %v39 = vld [vmem:[#allocation3] sm:$0xff]
    %vm40 = vcmask 97280
    %41 = vst.msk [vmem:[#allocation2] sm:$0xff] %vm40, %v39
    %v42 = vld [vmem:[#allocation2] sm:$0xff]
    %v43 = vld [vmem:[#allocation6] sm:$0xff]
    %v44 = vld [vmem:[#allocation6 + $0x8] sm:$0xff]
    %v45 = vld [vmem:[#allocation6 + $0x10] sm:$0xff]
    %v46 = vld [vmem:[#allocation6 + $0x18] sm:$0xff]
    %v47 = vld [vmem:[#allocation6 + $0x20] sm:$0xff]
    %v48 = vld [vmem:[#allocation6 + $0x28] sm:$0xff]
    %v49 = vld [vmem:[#allocation6 + $0x30] sm:$0xff]
    %v50 = vld [vmem:[#allocation6 + $0x38] sm:$0xff]
    %v51 = vld [vmem:[#allocation6 + $0x40] sm:$0xff]
    %v52 = vld [vmem:[#allocation6 + $0x48] sm:$0xff]
    %v53 = vld [vmem:[#allocation6 + $0x50] sm:$0xff]
    %v54 = vld [vmem:[#allocation6 + $0x58] sm:$0xff]
    %v55 = vld [vmem:[#allocation6 + $0x60] sm:$0xff]
    %v56 = vld [vmem:[#allocation6 + $0x68] sm:$0xff]
    %v57 = vld [vmem:[#allocation6 + $0x70] sm:$0xff]
    %v58 = vld [vmem:[#allocation6 + $0x78] sm:$0xff]
    %v59 = vld [vmem:[#allocation6 + $0x80] sm:$0x1]
    %v60 = vlaneseq
    %v61 = vshrl.u32 %v60, 7
    %v62 = vsub.s32 0, %v61
    %v63 = vrot.slane %v59, %v62
    %64 = vmatprep.subr.mxu0 0.0
    %65 = vmatpush1.msra.mxu0 %v43
    %66 = vmatprep.subr.mxu0 0.0
    %67 = vmatpush1.msra.mxu0 %v44
    %68 = vmatprep.subr.mxu0 0.0
    %69 = vmatpush1.msra.mxu0 %v45
    %70 = vmatprep.subr.mxu0 0.0
    %71 = vmatpush1.msra.mxu0 %v46
    %72 = vmatprep.subr.mxu0 0.0
    %73 = vmatpush1.msra.mxu0 %v47
    %74 = vmatprep.subr.mxu0 0.0
    %75 = vmatpush1.msra.mxu0 %v48
    %76 = vmatprep.subr.mxu0 0.0
    %77 = vmatpush1.msra.mxu0 %v49
    %78 = vmatprep.subr.mxu0 0.0
    %79 = vmatpush1.msra.mxu0 %v50
    %80 = vmatprep.subr.mxu0 0.0
    %81 = vmatpush1.msra.mxu0 %v51
    %82 = vmatprep.subr.mxu0 0.0
    %83 = vmatpush1.msra.mxu0 %v52
    %84 = vmatprep.subr.mxu0 0.0
    %85 = vmatpush1.msra.mxu0 %v53
    %86 = vmatprep.subr.mxu0 0.0
    %87 = vmatpush1.msra.mxu0 %v54
    %88 = vmatprep.subr.mxu0 0.0
    %89 = vmatpush1.msra.mxu0 %v55
    %90 = vmatprep.subr.mxu0 0.0
    %91 = vmatpush1.msra.mxu0 %v56
    %92 = vmatprep.subr.mxu0 0.0
    %93 = vmatpush1.msra.mxu0 %v57
    %94 = vmatprep.subr.mxu0 0.0
    %95 = vmatpush1.msra.mxu0 %v58
    %96 = vmatprep.subr.mxu0 0.0
    %97 = vmatpush1.msra.mxu0 0.0
    %98 = vmatprep.subr.mxu0 0.0
    %99 = vmatpush1.msra.mxu0 0.0
    %100 = vmatprep.subr.mxu0 0.0
    %101 = vmatpush1.msra.mxu0 0.0
    %102 = vmatprep.subr.mxu0 0.0
    %103 = vmatpush1.msra.mxu0 0.0
    %104 = vmatprep.subr.mxu0 0.0
    %105 = vmatpush1.msra.mxu0 0.0
    %106 = vmatprep.subr.mxu0 0.0
    %107 = vmatpush1.msra.mxu0 0.0
    %108 = vmatprep.subr.mxu0 0.0
    %109 = vmatpush1.msra.mxu0 0.0
    %110 = vmatprep.subr.mxu0 0.0
    %111 = vmatpush1.msra.mxu0 0.0
    %112 = vmatprep.subr.mxu0 0.0
    %113 = vmatpush1.msra.mxu0 0.0
    %114 = vmatprep.subr.mxu0 0.0
    %115 = vmatpush1.msra.mxu0 0.0
    %116 = vmatprep.subr.mxu0 0.0
    %117 = vmatpush1.msra.mxu0 0.0
    %118 = vmatprep.subr.mxu0 0.0
    %119 = vmatpush1.msra.mxu0 0.0
    %120 = vmatprep.subr.mxu0 0.0
    %121 = vmatpush1.msra.mxu0 0.0
    %122 = vmatprep.subr.mxu0 0.0
    %123 = vmatpush1.msra.mxu0 0.0
    %124 = vmatprep.subr.mxu0 0.0
    %125 = vmatpush1.msra.mxu0 0.0
    %126 = vmatprep.subr.mxu0 0.0
    %127 = vmatpush1.msra.mxu0 0.0
    %128 = vmatprep.mubr.f32.mxu0 0.0
    %129 = vmatmul.mubr.f32.gmra.mrb[0].mxu0 %v42
    %v130 = vpop.f32.mrb[0].mxu0
    %v131 = vadd.f32 %v63, %v130
    %v132 = vpop.f32.mrb[0].mxu0
    %133 = vdwg.mxu0
    %v134 = vmax.f32 %v131, 0.0
    %v135 = vld [vmem:[#allocation6 + $0x88] sm:$0xff]
    %v136 = vld [vmem:[#allocation6 + $0x90] sm:$0xff]
    %v137 = vld [vmem:[#allocation6 + $0x98] sm:$0xff]
    %v138 = vld [vmem:[#allocation6 + $0xa0] sm:$0xff]
    %v139 = vld [vmem:[#allocation6 + $0xa8] sm:$0xff]
    %v140 = vld [vmem:[#allocation6 + $0xb0] sm:$0xff]
    %v141 = vld [vmem:[#allocation6 + $0xb8] sm:$0xff]
    %v142 = vld [vmem:[#allocation6 + $0xc0] sm:$0xff]
    %v143 = vld [vmem:[#allocation6 + $0xc8] sm:$0xff]
    %v144 = vld [vmem:[#allocation6 + $0xd0] sm:$0xff]
    %v145 = vld [vmem:[#allocation6 + $0xd8] sm:$0xff]
    %v146 = vld [vmem:[#allocation6 + $0xe0] sm:$0xff]
    %v147 = vld [vmem:[#allocation6 + $0xe8] sm:$0xff]
    %v148 = vld [vmem:[#allocation6 + $0xf0] sm:$0xff]
    %v149 = vld [vmem:[#allocation6 + $0xf8] sm:$0xff]
    %v150 = vld [vmem:[#allocation6 + $0x100] sm:$0xff]
    %v151 = vld [vmem:[#allocation6 + $0x108] sm:$0x1]
    %v152 = vlaneseq
    %v153 = vshrl.u32 %v152, 7
    %v154 = vsub.s32 0, %v153
    %v155 = vrot.slane %v151, %v154
    %156 = vmatprep.subr.mxu0 0.0
    %157 = vmatpush1.msra.mxu0 %v135
    %158 = vmatprep.subr.mxu0 0.0
    %159 = vmatpush1.msra.mxu0 %v136
    %160 = vmatprep.subr.mxu0 0.0
    %161 = vmatpush1.msra.mxu0 %v137
    %162 = vmatprep.subr.mxu0 0.0
    %163 = vmatpush1.msra.mxu0 %v138
    %164 = vmatprep.subr.mxu0 0.0
    %165 = vmatpush1.msra.mxu0 %v139
    %166 = vmatprep.subr.mxu0 0.0
    %167 = vmatpush1.msra.mxu0 %v140
    %168 = vmatprep.subr.mxu0 0.0
    %169 = vmatpush1.msra.mxu0 %v141
    %170 = vmatprep.subr.mxu0 0.0
    %171 = vmatpush1.msra.mxu0 %v142
    %172 = vmatprep.subr.mxu0 0.0
    %173 = vmatpush1.msra.mxu0 %v143
    %174 = vmatprep.subr.mxu0 0.0
    %175 = vmatpush1.msra.mxu0 %v144
    %176 = vmatprep.subr.mxu0 0.0
    %177 = vmatpush1.msra.mxu0 %v145
    %178 = vmatprep.subr.mxu0 0.0
    %179 = vmatpush1.msra.mxu0 %v146
    %180 = vmatprep.subr.mxu0 0.0
    %181 = vmatpush1.msra.mxu0 %v147
    %182 = vmatprep.subr.mxu0 0.0
    %183 = vmatpush1.msra.mxu0 %v148
    %184 = vmatprep.subr.mxu0 0.0
    %185 = vmatpush1.msra.mxu0 %v149
    %186 = vmatprep.subr.mxu0 0.0
    %187 = vmatpush1.msra.mxu0 %v150
    %188 = vmatprep.subr.mxu0 0.0
    %189 = vmatpush1.msra.mxu0 0.0
    %190 = vmatprep.subr.mxu0 0.0
    %191 = vmatpush1.msra.mxu0 0.0
    %192 = vmatprep.subr.mxu0 0.0
    %193 = vmatpush1.msra.mxu0 0.0
    %194 = vmatprep.subr.mxu0 0.0
    %195 = vmatpush1.msra.mxu0 0.0
    %196 = vmatprep.subr.mxu0 0.0
    %197 = vmatpush1.msra.mxu0 0.0
    %198 = vmatprep.subr.mxu0 0.0
    %199 = vmatpush1.msra.mxu0 0.0
    %200 = vmatprep.subr.mxu0 0.0
    %201 = vmatpush1.msra.mxu0 0.0
    %202 = vmatprep.subr.mxu0 0.0
    %203 = vmatpush1.msra.mxu0 0.0
    %204 = vmatprep.subr.mxu0 0.0
    %205 = vmatpush1.msra.mxu0 0.0
    %206 = vmatprep.subr.mxu0 0.0
    %207 = vmatpush1.msra.mxu0 0.0
    %208 = vmatprep.subr.mxu0 0.0
    %209 = vmatpush1.msra.mxu0 0.0
    %210 = vmatprep.subr.mxu0 0.0
    %211 = vmatpush1.msra.mxu0 0.0
    %212 = vmatprep.subr.mxu0 0.0
    %213 = vmatpush1.msra.mxu0 0.0
    %214 = vmatprep.subr.mxu0 0.0
    %215 = vmatpush1.msra.mxu0 0.0
    %216 = vmatprep.subr.mxu0 0.0
    %217 = vmatpush1.msra.mxu0 0.0
    %218 = vmatprep.subr.mxu0 0.0
    %219 = vmatpush1.msra.mxu0 0.0
    %220 = vmatprep.mubr.f32.mxu0 0.0
    %221 = vmatmul.mubr.f32.gmra.mrb[0].mxu0 %v134
    %v222 = vpop.f32.mrb[0].mxu0
    %v223 = vadd.f32 %v155, %v222
    %v224 = vpop.f32.mrb[0].mxu0
    %225 = vdwg.mxu0
    %v226 = vmax.f32 %v223, 0.0
    %v227 = vld [vmem:[#allocation6 + $0x110] sm:$0xff]
    %v228 = vld [vmem:[#allocation6 + $0x118] sm:$0xff]
    %v229 = vld [vmem:[#allocation6 + $0x120] sm:$0xff]
    %v230 = vld [vmem:[#allocation6 + $0x128] sm:$0xff]
    %v231 = vld [vmem:[#allocation6 + $0x130] sm:$0xff]
    %v232 = vld [vmem:[#allocation6 + $0x138] sm:$0xff]
    %v233 = vld [vmem:[#allocation6 + $0x140] sm:$0xff]
    %v234 = vld [vmem:[#allocation6 + $0x148] sm:$0xff]
    %v235 = vld [vmem:[#allocation6 + $0x150] sm:$0xff]
    %v236 = vld [vmem:[#allocation6 + $0x158] sm:$0xff]
    %v237 = vld [vmem:[#allocation6 + $0x160] sm:$0xff]
    %v238 = vld [vmem:[#allocation6 + $0x168] sm:$0xff]
    %v239 = vld [vmem:[#allocation6 + $0x170] sm:$0xff]
    %v240 = vld [vmem:[#allocation6 + $0x178] sm:$0xff]
    %v241 = vld [vmem:[#allocation6 + $0x180] sm:$0xff]
    %v242 = vld [vmem:[#allocation6 + $0x188] sm:$0xff]
    %v243 = vld [vmem:[#allocation6 + $0x190] sm:$0x1]
    %v244 = vlaneseq
    %v245 = vshrl.u32 %v244, 7
    %v246 = vsub.s32 0, %v245
    %v247 = vrot.slane %v243, %v246
    %248 = vmatprep.subr.mxu0 0.0
    %249 = vmatpush1.msra.mxu0 %v227
    %250 = vmatprep.subr.mxu0 0.0
    %251 = vmatpush1.msra.mxu0 %v228
    %252 = vmatprep.subr.mxu0 0.0
    %253 = vmatpush1.msra.mxu0 %v229
    %254 = vmatprep.subr.mxu0 0.0
    %255 = vmatpush1.msra.mxu0 %v230
    %256 = vmatprep.subr.mxu0 0.0
    %257 = vmatpush1.msra.mxu0 %v231
    %258 = vmatprep.subr.mxu0 0.0
    %259 = vmatpush1.msra.mxu0 %v232
    %260 = vmatprep.subr.mxu0 0.0
    %261 = vmatpush1.msra.mxu0 %v233
    %262 = vmatprep.subr.mxu0 0.0
    %263 = vmatpush1.msra.mxu0 %v234
    %264 = vmatprep.subr.mxu0 0.0
    %265 = vmatpush1.msra.mxu0 %v235
    %266 = vmatprep.subr.mxu0 0.0
    %267 = vmatpush1.msra.mxu0 %v236
    %268 = vmatprep.subr.mxu0 0.0
    %269 = vmatpush1.msra.mxu0 %v237
    %270 = vmatprep.subr.mxu0 0.0
    %271 = vmatpush1.msra.mxu0 %v238
    %272 = vmatprep.subr.mxu0 0.0
    %273 = vmatpush1.msra.mxu0 %v239
    %274 = vmatprep.subr.mxu0 0.0
    %275 = vmatpush1.msra.mxu0 %v240
    %276 = vmatprep.subr.mxu0 0.0
    %277 = vmatpush1.msra.mxu0 %v241
    %278 = vmatprep.subr.mxu0 0.0
    %279 = vmatpush1.msra.mxu0 %v242
    %280 = vmatprep.subr.mxu0 0.0
    %281 = vmatpush1.msra.mxu0 0.0
    %282 = vmatprep.subr.mxu0 0.0
    %283 = vmatpush1.msra.mxu0 0.0
    %284 = vmatprep.subr.mxu0 0.0
    %285 = vmatpush1.msra.mxu0 0.0
    %286 = vmatprep.subr.mxu0 0.0
    %287 = vmatpush1.msra.mxu0 0.0
    %288 = vmatprep.subr.mxu0 0.0
    %289 = vmatpush1.msra.mxu0 0.0
    %290 = vmatprep.subr.mxu0 0.0
    %291 = vmatpush1.msra.mxu0 0.0
    %292 = vmatprep.subr.mxu0 0.0
    %293 = vmatpush1.msra.mxu0 0.0
    %294 = vmatprep.subr.mxu0 0.0
    %295 = vmatpush1.msra.mxu0 0.0
    %296 = vmatprep.subr.mxu0 0.0
    %297 = vmatpush1.msra.mxu0 0.0
    %298 = vmatprep.subr.mxu0 0.0
    %299 = vmatpush1.msra.mxu0 0.0
    %300 = vmatprep.subr.mxu0 0.0
    %301 = vmatpush1.msra.mxu0 0.0
    %302 = vmatprep.subr.mxu0 0.0
    %303 = vmatpush1.msra.mxu0 0.0
    %304 = vmatprep.subr.mxu0 0.0
    %305 = vmatpush1.msra.mxu0 0.0
    %306 = vmatprep.subr.mxu0 0.0
    %307 = vmatpush1.msra.mxu0 0.0
    %308 = vmatprep.subr.mxu0 0.0
    %309 = vmatpush1.msra.mxu0 0.0
    %310 = vmatprep.subr.mxu0 0.0
    %311 = vmatpush1.msra.mxu0 0.0
    %312 = vmatprep.mubr.f32.mxu0 0.0
    %313 = vmatmul.mubr.f32.gmra.mrb[0].mxu0 %v226
    %v314 = vpop.f32.mrb[0].mxu0
    %v315 = vadd.f32 %v247, %v314
    %v316 = vpop.f32.mrb[0].mxu0
    %317 = vdwg.mxu0
    %v318 = vmax.f32 %v315, 0.0
    %v319 = vld [vmem:[#allocation6 + $0x198] sm:$0xff]
    %v320 = vld [vmem:[#allocation6 + $0x1a0] sm:$0xff]
    %v321 = vld [vmem:[#allocation6 + $0x1a8] sm:$0xff]
    %v322 = vld [vmem:[#allocation6 + $0x1b0] sm:$0xff]
    %v323 = vld [vmem:[#allocation6 + $0x1b8] sm:$0xff]
    %v324 = vld [vmem:[#allocation6 + $0x1c0] sm:$0xff]
    %v325 = vld [vmem:[#allocation6 + $0x1c8] sm:$0xff]
    %v326 = vld [vmem:[#allocation6 + $0x1d0] sm:$0xff]
    %v327 = vld [vmem:[#allocation6 + $0x1d8] sm:$0xff]
    %v328 = vld [vmem:[#allocation6 + $0x1e0] sm:$0xff]
    %v329 = vld [vmem:[#allocation6 + $0x1e8] sm:$0xff]
    %v330 = vld [vmem:[#allocation6 + $0x1f0] sm:$0xff]
    %v331 = vld [vmem:[#allocation6 + $0x1f8] sm:$0xff]
    %v332 = vld [vmem:[#allocation6 + $0x200] sm:$0xff]
    %v333 = vld [vmem:[#allocation6 + $0x208] sm:$0xff]
    %v334 = vld [vmem:[#allocation6 + $0x210] sm:$0xff]
    %v335 = vld [vmem:[#allocation6 + $0x218] sm:$0x1]
    %v336 = vlaneseq
    %v337 = vshrl.u32 %v336, 7
    %v338 = vsub.s32 0, %v337
    %v339 = vrot.slane %v335, %v338
    %340 = vmatprep.subr.mxu0 0.0
    %341 = vmatpush1.msra.mxu0 %v319
    %342 = vmatprep.subr.mxu0 0.0
    %343 = vmatpush1.msra.mxu0 %v320
    %344 = vmatprep.subr.mxu0 0.0
    %345 = vmatpush1.msra.mxu0 %v321
    %346 = vmatprep.subr.mxu0 0.0
    %347 = vmatpush1.msra.mxu0 %v322
    %348 = vmatprep.subr.mxu0 0.0
    %349 = vmatpush1.msra.mxu0 %v323
    %350 = vmatprep.subr.mxu0 0.0
    %351 = vmatpush1.msra.mxu0 %v324
    %352 = vmatprep.subr.mxu0 0.0
    %353 = vmatpush1.msra.mxu0 %v325
    %354 = vmatprep.subr.mxu0 0.0
    %355 = vmatpush1.msra.mxu0 %v326
    %356 = vmatprep.subr.mxu0 0.0
    %357 = vmatpush1.msra.mxu0 %v327
    %358 = vmatprep.subr.mxu0 0.0
    %359 = vmatpush1.msra.mxu0 %v328
    %360 = vmatprep.subr.mxu0 0.0
    %361 = vmatpush1.msra.mxu0 %v329
    %362 = vmatprep.subr.mxu0 0.0
    %363 = vmatpush1.msra.mxu0 %v330
    %364 = vmatprep.subr.mxu0 0.0
    %365 = vmatpush1.msra.mxu0 %v331
    %366 = vmatprep.subr.mxu0 0.0
    %367 = vmatpush1.msra.mxu0 %v332
    %368 = vmatprep.subr.mxu0 0.0
    %369 = vmatpush1.msra.mxu0 %v333
    %370 = vmatprep.subr.mxu0 0.0
    %371 = vmatpush1.msra.mxu0 %v334
    %372 = vmatprep.subr.mxu0 0.0
    %373 = vmatpush1.msra.mxu0 0.0
    %374 = vmatprep.subr.mxu0 0.0
    %375 = vmatpush1.msra.mxu0 0.0
    %376 = vmatprep.subr.mxu0 0.0
    %377 = vmatpush1.msra.mxu0 0.0
    %378 = vmatprep.subr.mxu0 0.0
    %379 = vmatpush1.msra.mxu0 0.0
    %380 = vmatprep.subr.mxu0 0.0
    %381 = vmatpush1.msra.mxu0 0.0
    %382 = vmatprep.subr.mxu0 0.0
    %383 = vmatpush1.msra.mxu0 0.0
    %384 = vmatprep.subr.mxu0 0.0
    %385 = vmatpush1.msra.mxu0 0.0
    %386 = vmatprep.subr.mxu0 0.0
    %387 = vmatpush1.msra.mxu0 0.0
    %388 = vmatprep.subr.mxu0 0.0
    %389 = vmatpush1.msra.mxu0 0.0
    %390 = vmatprep.subr.mxu0 0.0
    %391 = vmatpush1.msra.mxu0 0.0
    %392 = vmatprep.subr.mxu0 0.0
    %393 = vmatpush1.msra.mxu0 0.0
    %394 = vmatprep.subr.mxu0 0.0
    %395 = vmatpush1.msra.mxu0 0.0
    %396 = vmatprep.subr.mxu0 0.0
    %397 = vmatpush1.msra.mxu0 0.0
    %398 = vmatprep.subr.mxu0 0.0
    %399 = vmatpush1.msra.mxu0 0.0
    %400 = vmatprep.subr.mxu0 0.0
    %401 = vmatpush1.msra.mxu0 0.0
    %402 = vmatprep.subr.mxu0 0.0
    %403 = vmatpush1.msra.mxu0 0.0
    %404 = vmatprep.mubr.f32.mxu0 0.0
    %405 = vmatmul.mubr.f32.gmra.mrb[0].mxu0 %v318
    %v406 = vpop.f32.mrb[0].mxu0
    %v407 = vadd.f32 %v339, %v406
    %v408 = vpop.f32.mrb[0].mxu0
    %409 = vdwg.mxu0
    %410 = vmax.xlane.f32.xlu0 %v407
    %v411 = vpop.xlane.xlu0 %410
    %v412 = vsub.f32 %v407, %v411
    %v413 = vmul.f32 %v412, 1.442695
    %v414 = vpow.pop %v413
    %415 = vadd.xlane.f32.xlu0 %v414
    %v416 = vpop.xlane.xlu0 %415
    %v417 = vrcp.pop %v416
    %v418 = vmul.f32 %v414, %v417
    %vm419 = vcmask 64512
    %420 = vst.msk [vmem:[#allocation8] sm:$0xff] %vm419, %v418
    // Predicated region
    $region18: #{tpu_custom_call.1} parent=1 // pred_check
      _
    $region19: #{tpu_custom_call.1} parent=1 // pred_check_branch
      %422 = sbr.rel (0) target = $region21
    $region20: #{tpu_custom_call.1} parent=1 // pred_region
      %s424 = ssub.s32 128, 128
      %425 = vsyncadd [#allocation5], %s424
      %s427 = sshll.u32 [#allocation8], 4
      %s428 = int_to_ptr.vmem [resolvable:$true] %s427
      %430 = dma.vmem_to_hbm [thread:$0]  %s428, 128, %s2, [#allocation5]
    $region21: #{tpu_custom_call.1} parent=1 // pred_fallthru
      _
    // Predicated region
    $region22: #{tpu_custom_call.1} parent=1 // pred_check
      _
    $region23: #{tpu_custom_call.1} parent=1 // pred_check_branch
      %432 = sbr.rel (0) target = $region25
    $region24: #{tpu_custom_call.1} parent=1 // pred_region
      %433 = dma.done [#allocation5], 128
    $region25: #{tpu_custom_call.1} parent=1 // pred_fallthru
      _
    %434 = vsyncpa [#allocation4], 1
    %435 = vsyncpa [#allocation7], 1
    %436 = vsyncpa [#allocation5], 1

</llo_original>
